<compile_context>
chip_gen: v7x
topology: tpu7x:2x2x1
jax: 0.10.0
libtpu: 0.0.40
codegen_flags: <defaults>
</compile_context>

<pallas_src>
import functools

import jax
import jax.numpy as jnp
from jax.experimental import pallas as pl
from jax.experimental.pallas import tpu as pltpu

BN_EPS = 1e-5
LANE = 128
SUBLANE = 8
# Large batch tiles amortize the ~600-cycle per-grid-step overhead (v6e guidance:
# 512+ rows). With every padded feature dim == 128, a (512, 128) f32 tile is
# 256 KiB, comfortably within v7x's smaller 64 MiB VMEM even double-buffered.
DEFAULT_TILE_B = 512


def _round_up(n, m):
    return ((n + m - 1) // m) * m


def _pad2d(a, rows, cols):
    return jnp.pad(a, ((0, rows - a.shape[0]), (0, cols - a.shape[1])))


def simple_dnn_kernel(x_ref,
                      w1_ref, b1_ref,
                      w2_ref, b2_ref,
                      w3_ref, b3_ref,
                      w4_ref, b4_ref,
                      o_ref):
    # fc1 (+ folded bn1) -> relu -> dropout(eval: identity)
    h = jnp.dot(x_ref[...], w1_ref[...], preferred_element_type=jnp.float32)
    h = jnp.maximum(h + b1_ref[...], 0.0)
    # fc2 (+ folded bn2) -> relu
    h = jnp.dot(h, w2_ref[...], preferred_element_type=jnp.float32)
    h = jnp.maximum(h + b2_ref[...], 0.0)
    # fc3 (+ folded bn3) -> relu
    h = jnp.dot(h, w3_ref[...], preferred_element_type=jnp.float32)
    h = jnp.maximum(h + b3_ref[...], 0.0)
    # fc4
    o_ref[...] = jnp.dot(h, w4_ref[...],
                         preferred_element_type=jnp.float32) + b4_ref[...]


def _fold_bn_into_linear(w, b, gamma, beta, rmean, rvar, eps=BN_EPS):
    """w: (in, out), b: (out,). Returns W' = W*s, b' = b*s + t (eval-mode BN)."""
    scale = gamma / jnp.sqrt(rvar + eps)
    shift = beta - rmean * scale
    return w * scale[None, :], b * scale + shift


@functools.partial(jax.jit, static_argnames=("tile_b",))
def simple_dnn_forward(x, params, tile_b=DEFAULT_TILE_B):
    B, in_size = x.shape
    hidden = params["w1"].shape[1]
    half = params["w2"].shape[1]
    out_size = params["w4"].shape[1]

    # ---- fold BN (eval-mode running stats) + bias into the weights ----
    w1, b1 = _fold_bn_into_linear(params["w1"], params["b1"],
                                  params["g1"], params["be1"],
                                  params["m1"], params["v1"])
    w2, b2 = _fold_bn_into_linear(params["w2"], params["b2"],
                                  params["g2"], params["be2"],
                                  params["m2"], params["v2"])
    w3, b3 = _fold_bn_into_linear(params["w3"], params["b3"],
                                  params["g3"], params["be3"],
                                  params["m3"], params["v3"])
    w4, b4 = params["w4"], params["b4"]

    # ---- pad every feature dim to a multiple of 128 lanes (lane-dense) ----
    d0 = _round_up(in_size, LANE)
    d1 = _round_up(hidden, LANE)
    d2 = _round_up(half, LANE)
    d3 = _round_up(hidden, LANE)
    d4 = _round_up(out_size, LANE)

    w1p = _pad2d(w1, d0, d1)
    w2p = _pad2d(w2, d1, d2)
    w3p = _pad2d(w3, d2, d3)
    w4p = _pad2d(w4, d3, d4)
    b1p = _pad2d(b1[None, :], 1, d1)
    b2p = _pad2d(b2[None, :], 1, d2)
    b3p = _pad2d(b3[None, :], 1, d3)
    b4p = _pad2d(b4[None, :], 1, d4)

    # ---- batch tiling: tile must be a multiple of the 8-row sublane size ----
    tb = min(tile_b, _round_up(B, SUBLANE))
    Bp = _round_up(B, tb)
    xp = _pad2d(x.astype(jnp.float32), Bp, d0)

    grid = (pl.cdiv(Bp, tb),)

    def batch_map(i):
        return (i, 0)

    def resident_map(i):
        return (0, 0)

    out_padded = pl.pallas_call(
        simple_dnn_kernel,
        out_shape=jax.ShapeDtypeStruct((Bp, d4), jnp.float32),
        grid=grid,
        in_specs=[
            pl.BlockSpec((tb, d0), batch_map),        # x tile streams
            pl.BlockSpec((d0, d1), resident_map),     # weights/biases stay resident
            pl.BlockSpec((1, d1), resident_map),
            pl.BlockSpec((d1, d2), resident_map),
            pl.BlockSpec((1, d2), resident_map),
            pl.BlockSpec((d2, d3), resident_map),
            pl.BlockSpec((1, d3), resident_map),
            pl.BlockSpec((d3, d4), resident_map),
            pl.BlockSpec((1, d4), resident_map),
        ],
        out_specs=pl.BlockSpec((tb, d4), batch_map),
        compiler_params=pltpu.CompilerParams(
            dimension_semantics=("parallel",),        # 2 TCs on v7x; no-op on v5e/v6e
        ),
    )(xp, w1p, b1p, w2p, b2p, w3p, b3p, w4p, b4p)

    return out_padded[:B, :out_size]


def init_params(key, input_size, hidden_size, output_size):
    """PyTorch-equivalent parameters. Linear weights stored transposed: (in, out)."""
    half = round(hidden_size / 2)
    dims = [(input_size, hidden_size), (hidden_size, half),
            (half, hidden_size), (hidden_size, output_size)]
    params = {}
    keys = jax.random.split(key, 8)
    for i, (fan_in, fan_out) in enumerate(dims, start=1):
        bound = 1.0 / jnp.sqrt(jnp.float32(fan_in))
        params[f"w{i}"] = jax.random.uniform(keys[2 * (i - 1)], (fan_in, fan_out),
                                             jnp.float32, -bound, bound)
        params[f"b{i}"] = jax.random.uniform(keys[2 * (i - 1) + 1], (fan_out,),
                                             jnp.float32, -bound, bound)
    # BatchNorm1d parameters at nn.BatchNorm1d defaults (eval-mode running stats).
    for i, feat in enumerate([hidden_size, half, hidden_size], start=1):
        params[f"g{i}"] = jnp.ones((feat,), jnp.float32)    # gamma
        params[f"be{i}"] = jnp.zeros((feat,), jnp.float32)  # beta
        params[f"m{i}"] = jnp.zeros((feat,), jnp.float32)   # running_mean
        params[f"v{i}"] = jnp.ones((feat,), jnp.float32)    # running_var
    return params


def reference_forward(x, params):
    """Pure-JAX reference: Linear -> BN(eval) -> ReLU -> (Dropout=id) x3 -> Linear."""
    def bn(h, i):
        scale = params[f"g{i}"] / jnp.sqrt(params[f"v{i}"] + BN_EPS)
        return (h - params[f"m{i}"]) * scale + params[f"be{i}"]

    h = x @ params["w1"] + params["b1"]
    h = jnp.maximum(bn(h, 1), 0.0)
    h = h @ params["w2"] + params["b2"]
    h = jnp.maximum(bn(h, 2), 0.0)
    h = h @ params["w3"] + params["b3"]
    h = jnp.maximum(bn(h, 3), 0.0)
    return h @ params["w4"] + params["b4"]


if __name__ == "__main__":
    input_size, hidden_size, output_size = 16, 32, 8
    batch = 8

    key = jax.random.PRNGKey(0)
    k_x, k_p = jax.random.split(key)
    x = jax.random.normal(k_x, (batch, input_size), jnp.float32)
    params = init_params(k_p, input_size, hidden_size, output_size)

    out = simple_dnn_forward(x, params)
    out = jax.block_until_ready(out)

    ref = reference_forward(x, params)
    assert out.shape == (batch, output_size), out.shape
    assert jnp.allclose(out, ref, atol=1e-4, rtol=1e-4), (
        float(jnp.max(jnp.abs(out - ref))))

    print("KERNEL_OK")
</pallas_src>

<mosaic_0001>
module attributes {stable_mosaic.version = 11 : i64} {
  func.func @simple_dnn_kernel(%arg0: i32, %arg1: memref<8x128xf32, #tpu.memory_space<vmem>>, %arg2: memref<128x128xf32, #tpu.memory_space<vmem>>, %arg3: memref<1x128xf32, #tpu.memory_space<vmem>>, %arg4: memref<128x128xf32, #tpu.memory_space<vmem>>, %arg5: memref<1x128xf32, #tpu.memory_space<vmem>>, %arg6: memref<128x128xf32, #tpu.memory_space<vmem>>, %arg7: memref<1x128xf32, #tpu.memory_space<vmem>>, %arg8: memref<128x128xf32, #tpu.memory_space<vmem>>, %arg9: memref<1x128xf32, #tpu.memory_space<vmem>>, %arg10: memref<8x128xf32, #tpu.memory_space<vmem>>) attributes {dimension_semantics = [#tpu.dimension_semantics<parallel>], iteration_bounds = array<i64: 1>, scalar_prefetch = 0 : i64, scratch_operands = 0 : i64, tpu.core_type = #tpu.core_type<tc>, window_params = [{transform_indices = @transform_0, window_bounds = array<i64: 8, 128>}, {pipeline_mode = #tpu.pipeline_mode<synchronous>, transform_indices = @transform_1, window_bounds = array<i64: 128, 128>}, {pipeline_mode = #tpu.pipeline_mode<synchronous>, transform_indices = @transform_2, window_bounds = array<i64: 1, 128>}, {pipeline_mode = #tpu.pipeline_mode<synchronous>, transform_indices = @transform_3, window_bounds = array<i64: 128, 128>}, {pipeline_mode = #tpu.pipeline_mode<synchronous>, transform_indices = @transform_4, window_bounds = array<i64: 1, 128>}, {pipeline_mode = #tpu.pipeline_mode<synchronous>, transform_indices = @transform_5, window_bounds = array<i64: 128, 128>}, {pipeline_mode = #tpu.pipeline_mode<synchronous>, transform_indices = @transform_6, window_bounds = array<i64: 1, 128>}, {pipeline_mode = #tpu.pipeline_mode<synchronous>, transform_indices = @transform_7, window_bounds = array<i64: 128, 128>}, {pipeline_mode = #tpu.pipeline_mode<synchronous>, transform_indices = @transform_8, window_bounds = array<i64: 1, 128>}, {transform_indices = @transform_9, window_bounds = array<i64: 8, 128>}]} {
    %c0 = arith.constant 0 : index
    %c0_0 = arith.constant 0 : index
    %0 = vector.load %arg1[%c0, %c0_0] : memref<8x128xf32, #tpu.memory_space<vmem>>, vector<8x128xf32>
    %c0_1 = arith.constant 0 : index
    %c0_2 = arith.constant 0 : index
    %1 = vector.load %arg2[%c0_1, %c0_2] : memref<128x128xf32, #tpu.memory_space<vmem>>, vector<128x128xf32>
    %cst = arith.constant dense<0.000000e+00> : vector<8x128xf32>
    %2 = tpu.matmul %0, %1, %cst {dimension_numbers = #tpu.dot_dimension_numbers<[1], [0], [0], [1], [0, 0, 1, 1], [], []>} : vector<8x128xf32>, vector<128x128xf32>, vector<8x128xf32> -> vector<8x128xf32>
    %c0_3 = arith.constant 0 : index
    %c0_4 = arith.constant 0 : index
    %3 = vector.load %arg3[%c0_3, %c0_4] : memref<1x128xf32, #tpu.memory_space<vmem>>, vector<1x128xf32>
    %4 = vector.broadcast %3 : vector<1x128xf32> to vector<8x128xf32>
    %5 = arith.addf %2, %4 : vector<8x128xf32>
    %cst_5 = arith.constant 0.000000e+00 : f32
    %6 = vector.broadcast %cst_5 : f32 to vector<8x128xf32>
    %7 = arith.maximumf %5, %6 : vector<8x128xf32>
    %c0_6 = arith.constant 0 : index
    %c0_7 = arith.constant 0 : index
    %8 = vector.load %arg4[%c0_6, %c0_7] : memref<128x128xf32, #tpu.memory_space<vmem>>, vector<128x128xf32>
    %cst_8 = arith.constant dense<0.000000e+00> : vector<8x128xf32>
    %9 = tpu.matmul %7, %8, %cst_8 {dimension_numbers = #tpu.dot_dimension_numbers<[1], [0], [0], [1], [0, 0, 1, 1], [], []>} : vector<8x128xf32>, vector<128x128xf32>, vector<8x128xf32> -> vector<8x128xf32>
    %c0_9 = arith.constant 0 : index
    %c0_10 = arith.constant 0 : index
    %10 = vector.load %arg5[%c0_9, %c0_10] : memref<1x128xf32, #tpu.memory_space<vmem>>, vector<1x128xf32>
    %11 = vector.broadcast %10 : vector<1x128xf32> to vector<8x128xf32>
    %12 = arith.addf %9, %11 : vector<8x128xf32>
    %cst_11 = arith.constant 0.000000e+00 : f32
    %13 = vector.broadcast %cst_11 : f32 to vector<8x128xf32>
    %14 = arith.maximumf %12, %13 : vector<8x128xf32>
    %c0_12 = arith.constant 0 : index
    %c0_13 = arith.constant 0 : index
    %15 = vector.load %arg6[%c0_12, %c0_13] : memref<128x128xf32, #tpu.memory_space<vmem>>, vector<128x128xf32>
    %cst_14 = arith.constant dense<0.000000e+00> : vector<8x128xf32>
    %16 = tpu.matmul %14, %15, %cst_14 {dimension_numbers = #tpu.dot_dimension_numbers<[1], [0], [0], [1], [0, 0, 1, 1], [], []>} : vector<8x128xf32>, vector<128x128xf32>, vector<8x128xf32> -> vector<8x128xf32>
    %c0_15 = arith.constant 0 : index
    %c0_16 = arith.constant 0 : index
    %17 = vector.load %arg7[%c0_15, %c0_16] : memref<1x128xf32, #tpu.memory_space<vmem>>, vector<1x128xf32>
    %18 = vector.broadcast %17 : vector<1x128xf32> to vector<8x128xf32>
    %19 = arith.addf %16, %18 : vector<8x128xf32>
    %cst_17 = arith.constant 0.000000e+00 : f32
    %20 = vector.broadcast %cst_17 : f32 to vector<8x128xf32>
    %21 = arith.maximumf %19, %20 : vector<8x128xf32>
    %c0_18 = arith.constant 0 : index
    %c0_19 = arith.constant 0 : index
    %22 = vector.load %arg8[%c0_18, %c0_19] : memref<128x128xf32, #tpu.memory_space<vmem>>, vector<128x128xf32>
    %cst_20 = arith.constant dense<0.000000e+00> : vector<8x128xf32>
    %23 = tpu.matmul %21, %22, %cst_20 {dimension_numbers = #tpu.dot_dimension_numbers<[1], [0], [0], [1], [0, 0, 1, 1], [], []>} : vector<8x128xf32>, vector<128x128xf32>, vector<8x128xf32> -> vector<8x128xf32>
    %c0_21 = arith.constant 0 : index
    %c0_22 = arith.constant 0 : index
    %24 = vector.load %arg9[%c0_21, %c0_22] : memref<1x128xf32, #tpu.memory_space<vmem>>, vector<1x128xf32>
    %25 = vector.broadcast %24 : vector<1x128xf32> to vector<8x128xf32>
    %26 = arith.addf %23, %25 : vector<8x128xf32>
    %c0_23 = arith.constant 0 : index
    %c0_24 = arith.constant 0 : index
    %27 = vector.load %arg10[%c0_23, %c0_24] : memref<8x128xf32, #tpu.memory_space<vmem>>, vector<8x128xf32>
    tpu.vector_store %arg10[%c0_23, %c0_24], %26 {strides = array<i32>} : memref<8x128xf32, #tpu.memory_space<vmem>>, vector<8x128xf32>,
    return
  }
  func.func @transform_0(%arg0: i32) -> (i32, i32) {
    %c0_i32 = arith.constant 0 : i32
    %c0_i32_0 = arith.constant 0 : i32
    return %arg0, %c0_i32 : i32, i32
  }
  func.func @transform_1(%arg0: i32) -> (i32, i32) {
    %c0_i32 = arith.constant 0 : i32
    %c0_i32_0 = arith.constant 0 : i32
    %c0_i32_1 = arith.constant 0 : i32
    return %c0_i32, %c0_i32_0 : i32, i32
  }
  func.func @transform_2(%arg0: i32) -> (i32, i32) {
    %c0_i32 = arith.constant 0 : i32
    %c0_i32_0 = arith.constant 0 : i32
    %c0_i32_1 = arith.constant 0 : i32
    return %c0_i32, %c0_i32_0 : i32, i32
  }
  func.func @transform_3(%arg0: i32) -> (i32, i32) {
    %c0_i32 = arith.constant 0 : i32
    %c0_i32_0 = arith.constant 0 : i32
    %c0_i32_1 = arith.constant 0 : i32
    return %c0_i32, %c0_i32_0 : i32, i32
  }
  func.func @transform_4(%arg0: i32) -> (i32, i32) {
    %c0_i32 = arith.constant 0 : i32
    %c0_i32_0 = arith.constant 0 : i32
    %c0_i32_1 = arith.constant 0 : i32
    return %c0_i32, %c0_i32_0 : i32, i32
  }
  func.func @transform_5(%arg0: i32) -> (i32, i32) {
    %c0_i32 = arith.constant 0 : i32
    %c0_i32_0 = arith.constant 0 : i32
    %c0_i32_1 = arith.constant 0 : i32
    return %c0_i32, %c0_i32_0 : i32, i32
  }
  func.func @transform_6(%arg0: i32) -> (i32, i32) {
    %c0_i32 = arith.constant 0 : i32
    %c0_i32_0 = arith.constant 0 : i32
    %c0_i32_1 = arith.constant 0 : i32
    return %c0_i32, %c0_i32_0 : i32, i32
  }
  func.func @transform_7(%arg0: i32) -> (i32, i32) {
    %c0_i32 = arith.constant 0 : i32
    %c0_i32_0 = arith.constant 0 : i32
    %c0_i32_1 = arith.constant 0 : i32
    return %c0_i32, %c0_i32_0 : i32, i32
  }
  func.func @transform_8(%arg0: i32) -> (i32, i32) {
    %c0_i32 = arith.constant 0 : i32
    %c0_i32_0 = arith.constant 0 : i32
    %c0_i32_1 = arith.constant 0 : i32
    return %c0_i32, %c0_i32_0 : i32, i32
  }
  func.func @transform_9(%arg0: i32) -> (i32, i32) {
    %c0_i32 = arith.constant 0 : i32
    %c0_i32_0 = arith.constant 0 : i32
    return %arg0, %c0_i32 : i32, i32
  }
}

</mosaic_0001>

<llo_original>
// kernel: simple_dnn_forward.1
$region0: #{simple_dnn_forward.1}
  #allocation0 [shape = 'u32[]', space=smem, size = 0x4, offset = 0x4, fixed_abs, tag = 'smem constant byte address 0x4 - core index']
  #allocation1 [shape = 'u32[144,128]{1,0:T(1,128)}', space=vmem, size = 0x12000, scoped, tag = 'internal scratch']
  %s0 = inlined_call_operand.vmem [shape: f32[8,128], index: 0, kind: input, shape index: {}]
  %s1 = inlined_call_operand.vmem [shape: f32[128,128], index: 1, kind: input, shape index: {}]
  %s2 = inlined_call_operand.vmem [shape: f32[1,128], index: 2, kind: input, shape index: {}]
  %s3 = inlined_call_operand.vmem [shape: f32[128,128], index: 3, kind: input, shape index: {}]
  %s4 = inlined_call_operand.vmem [shape: f32[1,128], index: 4, kind: input, shape index: {}]
  %s5 = inlined_call_operand.vmem [shape: f32[128,128], index: 5, kind: input, shape index: {}]
  %s6 = inlined_call_operand.vmem [shape: f32[1,128], index: 6, kind: input, shape index: {}]
  %s7 = inlined_call_operand.vmem [shape: f32[128,128], index: 7, kind: input, shape index: {}]
  %s8 = inlined_call_operand.vmem [shape: f32[1,128], index: 8, kind: input, shape index: {}]
  %s9 = inlined_call_operand.hbm [shape: f32[8,128], index: 9, kind: output, shape index: {}]
  %s10 = sld [smem:[#allocation0]]
  $region46: #{simple_dnn_forward.1} parent=0
    _
  %s12 = ssub.s32 1, %s10
  %s13 = scalar_select 0, %s12, %s10
  $region1: #{simple_dnn_forward.1} parent=0
    #allocation2 [shape = 'u8[4096]{0}', space=vmem, size = 0x1000, scoped, tag = 'output window, operand 0, single buffered']
    #allocation3 [shape = 's32[1]{0}', space=sflag, size = 0x4, scoped, tag = 'scoped memory for simple_dnn_forward.1']
    %14 = vsyncpa [#allocation3], 0
    // Predicated region
    $region2: #{simple_dnn_forward.1} parent=1 // pred_check
      _
    $region3: #{simple_dnn_forward.1} parent=1 // pred_check_branch
      %16 = sbr.rel (0) target = $region5
    $region4: #{simple_dnn_forward.1} parent=1 // pred_region
      _
    $region5: #{simple_dnn_forward.1} parent=1 // pred_fallthru
      _
    // Predicated region
    $region6: #{simple_dnn_forward.1} parent=1 // pred_check
      _
    $region7: #{simple_dnn_forward.1} parent=1 // pred_check_branch
      %18 = sbr.rel (0) target = $region9
    $region8: #{simple_dnn_forward.1} parent=1 // pred_region
      _
    $region9: #{simple_dnn_forward.1} parent=1 // pred_fallthru
      _
    // Predicated region
    $region10: #{simple_dnn_forward.1} parent=1 // pred_check
      _
    $region11: #{simple_dnn_forward.1} parent=1 // pred_check_branch
      %20 = sbr.rel (0) target = $region13
    $region12: #{simple_dnn_forward.1} parent=1 // pred_region
      _
    $region13: #{simple_dnn_forward.1} parent=1 // pred_fallthru
      _
    // Predicated region
    $region14: #{simple_dnn_forward.1} parent=1 // pred_check
      _
    $region15: #{simple_dnn_forward.1} parent=1 // pred_check_branch
      %22 = sbr.rel (0) target = $region17
    $region16: #{simple_dnn_forward.1} parent=1 // pred_region
      _
    $region17: #{simple_dnn_forward.1} parent=1 // pred_fallthru
      _
    // Predicated region
    $region18: #{simple_dnn_forward.1} parent=1 // pred_check
      _
    $region19: #{simple_dnn_forward.1} parent=1 // pred_check_branch
      %24 = sbr.rel (0) target = $region21
    $region20: #{simple_dnn_forward.1} parent=1 // pred_region
      _
    $region21: #{simple_dnn_forward.1} parent=1 // pred_fallthru
      _
    // Predicated region
    $region22: #{simple_dnn_forward.1} parent=1 // pred_check
      _
    $region23: #{simple_dnn_forward.1} parent=1 // pred_check_branch
      %26 = sbr.rel (0) target = $region25
    $region24: #{simple_dnn_forward.1} parent=1 // pred_region
      _
    $region25: #{simple_dnn_forward.1} parent=1 // pred_fallthru
      _
    // Predicated region
    $region26: #{simple_dnn_forward.1} parent=1 // pred_check
      _
    $region27: #{simple_dnn_forward.1} parent=1 // pred_check_branch
      %28 = sbr.rel (0) target = $region29
    $region28: #{simple_dnn_forward.1} parent=1 // pred_region
      _
    $region29: #{simple_dnn_forward.1} parent=1 // pred_fallthru
      _
    // Predicated region
    $region30: #{simple_dnn_forward.1} parent=1 // pred_check
      _
    $region31: #{simple_dnn_forward.1} parent=1 // pred_check_branch
      %30 = sbr.rel (0) target = $region33
    $region32: #{simple_dnn_forward.1} parent=1 // pred_region
      _
    $region33: #{simple_dnn_forward.1} parent=1 // pred_fallthru
      _
    // Predicated region
    $region34: #{simple_dnn_forward.1} parent=1 // pred_check
      _
    $region35: #{simple_dnn_forward.1} parent=1 // pred_check_branch
      %32 = sbr.rel (0) target = $region37
    $region36: #{simple_dnn_forward.1} parent=1 // pred_region
      _
    $region37: #{simple_dnn_forward.1} parent=1 // pred_fallthru
      _
    %v33 = vld [vmem:[%s0] sm:$0xff]
    %v34 = vld [vmem:[%s1] sm:$0xff]
    %v35 = vld [vmem:[%s1 + $0x8] sm:$0xff]
    %v36 = vld [vmem:[%s1 + $0x10] sm:$0xff]
    %v37 = vld [vmem:[%s1 + $0x18] sm:$0xff]
    %v38 = vld [vmem:[%s1 + $0x20] sm:$0xff]
    %v39 = vld [vmem:[%s1 + $0x28] sm:$0xff]
    %v40 = vld [vmem:[%s1 + $0x30] sm:$0xff]
    %v41 = vld [vmem:[%s1 + $0x38] sm:$0xff]
    %v42 = vld [vmem:[%s1 + $0x40] sm:$0xff]
    %v43 = vld [vmem:[%s1 + $0x48] sm:$0xff]
    %v44 = vld [vmem:[%s1 + $0x50] sm:$0xff]
    %v45 = vld [vmem:[%s1 + $0x58] sm:$0xff]
    %v46 = vld [vmem:[%s1 + $0x60] sm:$0xff]
    %v47 = vld [vmem:[%s1 + $0x68] sm:$0xff]
    %v48 = vld [vmem:[%s1 + $0x70] sm:$0xff]
    %v49 = vld [vmem:[%s1 + $0x78] sm:$0xff]
    %v50 = vld [vmem:[%s2] sm:$0x1]
    %v52 = vlaneseq
    %v53 = vshrl.u32 %v52, 7
    %v54 = vsub.s32 0, %v53
    %v55 = vrot.slane %v50, %v54
    %57 = vmatprep.subr.mxu0 0.0
    %58 = vmatpush1.msra.mxu0 %v34
    %59 = vmatprep.subr.mxu0 0.0
    %60 = vmatpush1.msra.mxu0 %v35
    %61 = vmatprep.subr.mxu0 0.0
    %62 = vmatpush1.msra.mxu0 %v36
    %63 = vmatprep.subr.mxu0 0.0
    %64 = vmatpush1.msra.mxu0 %v37
    %65 = vmatprep.subr.mxu0 0.0
    %66 = vmatpush1.msra.mxu0 %v38
    %67 = vmatprep.subr.mxu0 0.0
    %68 = vmatpush1.msra.mxu0 %v39
    %69 = vmatprep.subr.mxu0 0.0
    %70 = vmatpush1.msra.mxu0 %v40
    %71 = vmatprep.subr.mxu0 0.0
    %72 = vmatpush1.msra.mxu0 %v41
    %73 = vmatprep.subr.mxu0 0.0
    %74 = vmatpush1.msra.mxu0 %v42
    %75 = vmatprep.subr.mxu0 0.0
    %76 = vmatpush1.msra.mxu0 %v43
    %77 = vmatprep.subr.mxu0 0.0
    %78 = vmatpush1.msra.mxu0 %v44
    %79 = vmatprep.subr.mxu0 0.0
    %80 = vmatpush1.msra.mxu0 %v45
    %81 = vmatprep.subr.mxu0 0.0
    %82 = vmatpush1.msra.mxu0 %v46
    %83 = vmatprep.subr.mxu0 0.0
    %84 = vmatpush1.msra.mxu0 %v47
    %85 = vmatprep.subr.mxu0 0.0
    %86 = vmatpush1.msra.mxu0 %v48
    %87 = vmatprep.subr.mxu0 0.0
    %88 = vmatpush1.msra.mxu0 %v49
    %89 = vmatprep.subr.mxu0 0.0
    %90 = vmatpush1.msra.mxu0 0.0
    %91 = vmatprep.subr.mxu0 0.0
    %92 = vmatpush1.msra.mxu0 0.0
    %93 = vmatprep.subr.mxu0 0.0
    %94 = vmatpush1.msra.mxu0 0.0
    %95 = vmatprep.subr.mxu0 0.0
    %96 = vmatpush1.msra.mxu0 0.0
    %97 = vmatprep.subr.mxu0 0.0
    %98 = vmatpush1.msra.mxu0 0.0
    %99 = vmatprep.subr.mxu0 0.0
    %100 = vmatpush1.msra.mxu0 0.0
    %101 = vmatprep.subr.mxu0 0.0
    %102 = vmatpush1.msra.mxu0 0.0
    %103 = vmatprep.subr.mxu0 0.0
    %104 = vmatpush1.msra.mxu0 0.0
    %105 = vmatprep.subr.mxu0 0.0
    %106 = vmatpush1.msra.mxu0 0.0
    %107 = vmatprep.subr.mxu0 0.0
    %108 = vmatpush1.msra.mxu0 0.0
    %109 = vmatprep.subr.mxu0 0.0
    %110 = vmatpush1.msra.mxu0 0.0
    %111 = vmatprep.subr.mxu0 0.0
    %112 = vmatpush1.msra.mxu0 0.0
    %113 = vmatprep.subr.mxu0 0.0
    %114 = vmatpush1.msra.mxu0 0.0
    %115 = vmatprep.subr.mxu0 0.0
    %116 = vmatpush1.msra.mxu0 0.0
    %117 = vmatprep.subr.mxu0 0.0
    %118 = vmatpush1.msra.mxu0 0.0
    %119 = vmatprep.subr.mxu0 0.0
    %120 = vmatpush1.msra.mxu0 0.0
    %121 = vmatprep.mubr.f32.mxu0 0.0
    %122 = vmatmul.mubr.f32.gmra.mrb[0].mxu0 %v33
    %v123 = vpop.f32.mrb[0].mxu0
    %v124 = vadd.f32 %v55, %v123
    %v125 = vpop.f32.mrb[0].mxu0
    %126 = vdwg.mxu0
    %v127 = vmax.f32 %v124, 0.0
    %v128 = vld [vmem:[%s3] sm:$0xff]
    %v129 = vld [vmem:[%s3 + $0x8] sm:$0xff]
    %v130 = vld [vmem:[%s3 + $0x10] sm:$0xff]
    %v131 = vld [vmem:[%s3 + $0x18] sm:$0xff]
    %v132 = vld [vmem:[%s3 + $0x20] sm:$0xff]
    %v133 = vld [vmem:[%s3 + $0x28] sm:$0xff]
    %v134 = vld [vmem:[%s3 + $0x30] sm:$0xff]
    %v135 = vld [vmem:[%s3 + $0x38] sm:$0xff]
    %v136 = vld [vmem:[%s3 + $0x40] sm:$0xff]
    %v137 = vld [vmem:[%s3 + $0x48] sm:$0xff]
    %v138 = vld [vmem:[%s3 + $0x50] sm:$0xff]
    %v139 = vld [vmem:[%s3 + $0x58] sm:$0xff]
    %v140 = vld [vmem:[%s3 + $0x60] sm:$0xff]
    %v141 = vld [vmem:[%s3 + $0x68] sm:$0xff]
    %v142 = vld [vmem:[%s3 + $0x70] sm:$0xff]
    %v143 = vld [vmem:[%s3 + $0x78] sm:$0xff]
    %v144 = vld [vmem:[%s4] sm:$0x1]
    %v146 = vlaneseq
    %v147 = vshrl.u32 %v146, 7
    %v148 = vsub.s32 0, %v147
    %v149 = vrot.slane %v144, %v148
    %151 = vmatprep.subr.mxu0 0.0
    %152 = vmatpush1.msra.mxu0 %v128
    %153 = vmatprep.subr.mxu0 0.0
    %154 = vmatpush1.msra.mxu0 %v129
    %155 = vmatprep.subr.mxu0 0.0
    %156 = vmatpush1.msra.mxu0 %v130
    %157 = vmatprep.subr.mxu0 0.0
    %158 = vmatpush1.msra.mxu0 %v131
    %159 = vmatprep.subr.mxu0 0.0
    %160 = vmatpush1.msra.mxu0 %v132
    %161 = vmatprep.subr.mxu0 0.0
    %162 = vmatpush1.msra.mxu0 %v133
    %163 = vmatprep.subr.mxu0 0.0
    %164 = vmatpush1.msra.mxu0 %v134
    %165 = vmatprep.subr.mxu0 0.0
    %166 = vmatpush1.msra.mxu0 %v135
    %167 = vmatprep.subr.mxu0 0.0
    %168 = vmatpush1.msra.mxu0 %v136
    %169 = vmatprep.subr.mxu0 0.0
    %170 = vmatpush1.msra.mxu0 %v137
    %171 = vmatprep.subr.mxu0 0.0
    %172 = vmatpush1.msra.mxu0 %v138
    %173 = vmatprep.subr.mxu0 0.0
    %174 = vmatpush1.msra.mxu0 %v139
    %175 = vmatprep.subr.mxu0 0.0
    %176 = vmatpush1.msra.mxu0 %v140
    %177 = vmatprep.subr.mxu0 0.0
    %178 = vmatpush1.msra.mxu0 %v141
    %179 = vmatprep.subr.mxu0 0.0
    %180 = vmatpush1.msra.mxu0 %v142
    %181 = vmatprep.subr.mxu0 0.0
    %182 = vmatpush1.msra.mxu0 %v143
    %183 = vmatprep.subr.mxu0 0.0
    %184 = vmatpush1.msra.mxu0 0.0
    %185 = vmatprep.subr.mxu0 0.0
    %186 = vmatpush1.msra.mxu0 0.0
    %187 = vmatprep.subr.mxu0 0.0
    %188 = vmatpush1.msra.mxu0 0.0
    %189 = vmatprep.subr.mxu0 0.0
    %190 = vmatpush1.msra.mxu0 0.0
    %191 = vmatprep.subr.mxu0 0.0
    %192 = vmatpush1.msra.mxu0 0.0
    %193 = vmatprep.subr.mxu0 0.0
    %194 = vmatpush1.msra.mxu0 0.0
    %195 = vmatprep.subr.mxu0 0.0
    %196 = vmatpush1.msra.mxu0 0.0
    %197 = vmatprep.subr.mxu0 0.0
    %198 = vmatpush1.msra.mxu0 0.0
    %199 = vmatprep.subr.mxu0 0.0
    %200 = vmatpush1.msra.mxu0 0.0
    %201 = vmatprep.subr.mxu0 0.0
    %202 = vmatpush1.msra.mxu0 0.0
    %203 = vmatprep.subr.mxu0 0.0
    %204 = vmatpush1.msra.mxu0 0.0
    %205 = vmatprep.subr.mxu0 0.0
    %206 = vmatpush1.msra.mxu0 0.0
    %207 = vmatprep.subr.mxu0 0.0
    %208 = vmatpush1.msra.mxu0 0.0
    %209 = vmatprep.subr.mxu0 0.0
    %210 = vmatpush1.msra.mxu0 0.0
    %211 = vmatprep.subr.mxu0 0.0
    %212 = vmatpush1.msra.mxu0 0.0
    %213 = vmatprep.subr.mxu0 0.0
    %214 = vmatpush1.msra.mxu0 0.0
    %215 = vmatprep.mubr.f32.mxu0 0.0
    %216 = vmatmul.mubr.f32.gmra.mrb[0].mxu0 %v127
    %v217 = vpop.f32.mrb[0].mxu0
    %v218 = vadd.f32 %v149, %v217
    %v219 = vpop.f32.mrb[0].mxu0
    %220 = vdwg.mxu0
    %v221 = vmax.f32 %v218, 0.0
    %v222 = vld [vmem:[%s5] sm:$0xff]
    %v223 = vld [vmem:[%s5 + $0x8] sm:$0xff]
    %v224 = vld [vmem:[%s5 + $0x10] sm:$0xff]
    %v225 = vld [vmem:[%s5 + $0x18] sm:$0xff]
    %v226 = vld [vmem:[%s5 + $0x20] sm:$0xff]
    %v227 = vld [vmem:[%s5 + $0x28] sm:$0xff]
    %v228 = vld [vmem:[%s5 + $0x30] sm:$0xff]
    %v229 = vld [vmem:[%s5 + $0x38] sm:$0xff]
    %v230 = vld [vmem:[%s5 + $0x40] sm:$0xff]
    %v231 = vld [vmem:[%s5 + $0x48] sm:$0xff]
    %v232 = vld [vmem:[%s5 + $0x50] sm:$0xff]
    %v233 = vld [vmem:[%s5 + $0x58] sm:$0xff]
    %v234 = vld [vmem:[%s5 + $0x60] sm:$0xff]
    %v235 = vld [vmem:[%s5 + $0x68] sm:$0xff]
    %v236 = vld [vmem:[%s5 + $0x70] sm:$0xff]
    %v237 = vld [vmem:[%s5 + $0x78] sm:$0xff]
    %v238 = vld [vmem:[%s6] sm:$0x1]
    %v240 = vlaneseq
    %v241 = vshrl.u32 %v240, 7
    %v242 = vsub.s32 0, %v241
    %v243 = vrot.slane %v238, %v242
    %245 = vmatprep.subr.mxu0 0.0
    %246 = vmatpush1.msra.mxu0 %v222
    %247 = vmatprep.subr.mxu0 0.0
    %248 = vmatpush1.msra.mxu0 %v223
    %249 = vmatprep.subr.mxu0 0.0
    %250 = vmatpush1.msra.mxu0 %v224
    %251 = vmatprep.subr.mxu0 0.0
    %252 = vmatpush1.msra.mxu0 %v225
    %253 = vmatprep.subr.mxu0 0.0
    %254 = vmatpush1.msra.mxu0 %v226
    %255 = vmatprep.subr.mxu0 0.0
    %256 = vmatpush1.msra.mxu0 %v227
    %257 = vmatprep.subr.mxu0 0.0
    %258 = vmatpush1.msra.mxu0 %v228
    %259 = vmatprep.subr.mxu0 0.0
    %260 = vmatpush1.msra.mxu0 %v229
    %261 = vmatprep.subr.mxu0 0.0
    %262 = vmatpush1.msra.mxu0 %v230
    %263 = vmatprep.subr.mxu0 0.0
    %264 = vmatpush1.msra.mxu0 %v231
    %265 = vmatprep.subr.mxu0 0.0
    %266 = vmatpush1.msra.mxu0 %v232
    %267 = vmatprep.subr.mxu0 0.0
    %268 = vmatpush1.msra.mxu0 %v233
    %269 = vmatprep.subr.mxu0 0.0
    %270 = vmatpush1.msra.mxu0 %v234
    %271 = vmatprep.subr.mxu0 0.0
    %272 = vmatpush1.msra.mxu0 %v235
    %273 = vmatprep.subr.mxu0 0.0
    %274 = vmatpush1.msra.mxu0 %v236
    %275 = vmatprep.subr.mxu0 0.0
    %276 = vmatpush1.msra.mxu0 %v237
    %277 = vmatprep.subr.mxu0 0.0
    %278 = vmatpush1.msra.mxu0 0.0
    %279 = vmatprep.subr.mxu0 0.0
    %280 = vmatpush1.msra.mxu0 0.0
    %281 = vmatprep.subr.mxu0 0.0
    %282 = vmatpush1.msra.mxu0 0.0
    %283 = vmatprep.subr.mxu0 0.0
    %284 = vmatpush1.msra.mxu0 0.0
    %285 = vmatprep.subr.mxu0 0.0
    %286 = vmatpush1.msra.mxu0 0.0
    %287 = vmatprep.subr.mxu0 0.0
    %288 = vmatpush1.msra.mxu0 0.0
    %289 = vmatprep.subr.mxu0 0.0
    %290 = vmatpush1.msra.mxu0 0.0
    %291 = vmatprep.subr.mxu0 0.0
    %292 = vmatpush1.msra.mxu0 0.0
    %293 = vmatprep.subr.mxu0 0.0
    %294 = vmatpush1.msra.mxu0 0.0
    %295 = vmatprep.subr.mxu0 0.0
    %296 = vmatpush1.msra.mxu0 0.0
    %297 = vmatprep.subr.mxu0 0.0
    %298 = vmatpush1.msra.mxu0 0.0
    %299 = vmatprep.subr.mxu0 0.0
    %300 = vmatpush1.msra.mxu0 0.0
    %301 = vmatprep.subr.mxu0 0.0
    %302 = vmatpush1.msra.mxu0 0.0
    %303 = vmatprep.subr.mxu0 0.0
    %304 = vmatpush1.msra.mxu0 0.0
    %305 = vmatprep.subr.mxu0 0.0
    %306 = vmatpush1.msra.mxu0 0.0
    %307 = vmatprep.subr.mxu0 0.0
    %308 = vmatpush1.msra.mxu0 0.0
    %309 = vmatprep.mubr.f32.mxu0 0.0
    %310 = vmatmul.mubr.f32.gmra.mrb[0].mxu0 %v221
    %v311 = vpop.f32.mrb[0].mxu0
    %v312 = vadd.f32 %v243, %v311
    %v313 = vpop.f32.mrb[0].mxu0
    %314 = vdwg.mxu0
    %v315 = vmax.f32 %v312, 0.0
    %v316 = vld [vmem:[%s7] sm:$0xff]
    %v317 = vld [vmem:[%s7 + $0x8] sm:$0xff]
    %v318 = vld [vmem:[%s7 + $0x10] sm:$0xff]
    %v319 = vld [vmem:[%s7 + $0x18] sm:$0xff]
    %v320 = vld [vmem:[%s7 + $0x20] sm:$0xff]
    %v321 = vld [vmem:[%s7 + $0x28] sm:$0xff]
    %v322 = vld [vmem:[%s7 + $0x30] sm:$0xff]
    %v323 = vld [vmem:[%s7 + $0x38] sm:$0xff]
    %v324 = vld [vmem:[%s7 + $0x40] sm:$0xff]
    %v325 = vld [vmem:[%s7 + $0x48] sm:$0xff]
    %v326 = vld [vmem:[%s7 + $0x50] sm:$0xff]
    %v327 = vld [vmem:[%s7 + $0x58] sm:$0xff]
    %v328 = vld [vmem:[%s7 + $0x60] sm:$0xff]
    %v329 = vld [vmem:[%s7 + $0x68] sm:$0xff]
    %v330 = vld [vmem:[%s7 + $0x70] sm:$0xff]
    %v331 = vld [vmem:[%s7 + $0x78] sm:$0xff]
    %v332 = vld [vmem:[%s8] sm:$0x1]
    %v334 = vlaneseq
    %v335 = vshrl.u32 %v334, 7
    %v336 = vsub.s32 0, %v335
    %v337 = vrot.slane %v332, %v336
    %339 = vmatprep.subr.mxu0 0.0
    %340 = vmatpush1.msra.mxu0 %v316
    %341 = vmatprep.subr.mxu0 0.0
    %342 = vmatpush1.msra.mxu0 %v317
    %343 = vmatprep.subr.mxu0 0.0
    %344 = vmatpush1.msra.mxu0 %v318
    %345 = vmatprep.subr.mxu0 0.0
    %346 = vmatpush1.msra.mxu0 %v319
    %347 = vmatprep.subr.mxu0 0.0
    %348 = vmatpush1.msra.mxu0 %v320
    %349 = vmatprep.subr.mxu0 0.0
    %350 = vmatpush1.msra.mxu0 %v321
    %351 = vmatprep.subr.mxu0 0.0
    %352 = vmatpush1.msra.mxu0 %v322
    %353 = vmatprep.subr.mxu0 0.0
    %354 = vmatpush1.msra.mxu0 %v323
    %355 = vmatprep.subr.mxu0 0.0
    %356 = vmatpush1.msra.mxu0 %v324
    %357 = vmatprep.subr.mxu0 0.0
    %358 = vmatpush1.msra.mxu0 %v325
    %359 = vmatprep.subr.mxu0 0.0
    %360 = vmatpush1.msra.mxu0 %v326
    %361 = vmatprep.subr.mxu0 0.0
    %362 = vmatpush1.msra.mxu0 %v327
    %363 = vmatprep.subr.mxu0 0.0
    %364 = vmatpush1.msra.mxu0 %v328
    %365 = vmatprep.subr.mxu0 0.0
    %366 = vmatpush1.msra.mxu0 %v329
    %367 = vmatprep.subr.mxu0 0.0
    %368 = vmatpush1.msra.mxu0 %v330
    %369 = vmatprep.subr.mxu0 0.0
    %370 = vmatpush1.msra.mxu0 %v331
    %371 = vmatprep.subr.mxu0 0.0
    %372 = vmatpush1.msra.mxu0 0.0
    %373 = vmatprep.subr.mxu0 0.0
    %374 = vmatpush1.msra.mxu0 0.0
    %375 = vmatprep.subr.mxu0 0.0
    %376 = vmatpush1.msra.mxu0 0.0
    %377 = vmatprep.subr.mxu0 0.0
    %378 = vmatpush1.msra.mxu0 0.0
    %379 = vmatprep.subr.mxu0 0.0
    %380 = vmatpush1.msra.mxu0 0.0
    %381 = vmatprep.subr.mxu0 0.0
    %382 = vmatpush1.msra.mxu0 0.0
    %383 = vmatprep.subr.mxu0 0.0
    %384 = vmatpush1.msra.mxu0 0.0
    %385 = vmatprep.subr.mxu0 0.0
    %386 = vmatpush1.msra.mxu0 0.0
    %387 = vmatprep.subr.mxu0 0.0
    %388 = vmatpush1.msra.mxu0 0.0
    %389 = vmatprep.subr.mxu0 0.0
    %390 = vmatpush1.msra.mxu0 0.0
    %391 = vmatprep.subr.mxu0 0.0
    %392 = vmatpush1.msra.mxu0 0.0
    %393 = vmatprep.subr.mxu0 0.0
    %394 = vmatpush1.msra.mxu0 0.0
    %395 = vmatprep.subr.mxu0 0.0
    %396 = vmatpush1.msra.mxu0 0.0
    %397 = vmatprep.subr.mxu0 0.0
    %398 = vmatpush1.msra.mxu0 0.0
    %399 = vmatprep.subr.mxu0 0.0
    %400 = vmatpush1.msra.mxu0 0.0
    %401 = vmatprep.subr.mxu0 0.0
    %402 = vmatpush1.msra.mxu0 0.0
    %403 = vmatprep.mubr.f32.mxu0 0.0
    %404 = vmatmul.mubr.f32.gmra.mrb[0].mxu0 %v315
    %v405 = vpop.f32.mrb[0].mxu0
    %v406 = vadd.f32 %v337, %v405
    %v407 = vpop.f32.mrb[0].mxu0
    %408 = vdwg.mxu0
    %409 = vst [vmem:[#allocation2] sm:$0xff] %v406
    // Predicated region
    $region38: #{simple_dnn_forward.1} parent=1 // pred_check
      _
    $region39: #{simple_dnn_forward.1} parent=1 // pred_check_branch
      %411 = sbr.rel (0) target = $region41
    $region40: #{simple_dnn_forward.1} parent=1 // pred_region
      %s413 = ssub.s32 128, 128
      %414 = vsyncadd [#allocation3], %s413
      %s416 = sshll.u32 [#allocation2], 4
      %s417 = int_to_ptr.vmem [resolvable:$true] %s416
      %419 = dma.vmem_to_hbm [thread:$0]  %s417, 128, %s9, [#allocation3]
    $region41: #{simple_dnn_forward.1} parent=1 // pred_fallthru
      _
    // Predicated region
    $region42: #{simple_dnn_forward.1} parent=1 // pred_check
      _
    $region43: #{simple_dnn_forward.1} parent=1 // pred_check_branch
      %421 = sbr.rel (0) target = $region45
    $region44: #{simple_dnn_forward.1} parent=1 // pred_region
      %422 = dma.done [#allocation3], 128
    $region45: #{simple_dnn_forward.1} parent=1 // pred_fallthru
      _
    %423 = vsyncpa [#allocation3], 1

</llo_original>
